<compile_context>
chip_gen: v5e
topology: v5e:2x2
jax: 0.10.0
libtpu: 0.0.40
codegen_flags: <defaults>
</compile_context>

<pallas_src>
import jax
import jax.numpy as jnp
from jax.experimental import pallas as pl
from jax.experimental.pallas import tpu as pltpu

_LANE = 512            # lane-dense last dim (multiple of 128)
_MAX_BLOCK_ROWS = 1024  # 1024 x 512 f32 = 2 MiB per block


def _h_swish_kernel(x_ref, o_ref):
    x = x_ref[...]
    # h_sigmoid(x) = relu6(x + 3) / 6, implemented as clip * (1/6) (VALU only).
    s = jnp.clip(x + 3.0, 0.0, 6.0) * (1.0 / 6.0)
    o_ref[...] = (x * s).astype(o_ref.dtype)


def h_swish(x):
    """Elementwise x * relu6(x + 3) / 6, any shape/dtype."""
    orig_shape = x.shape
    dtype = x.dtype
    n = x.size

    # Repack into a lane-dense (rows, _LANE) slab, padding with zeros.
    rows = -(-n // _LANE)
    block_rows = min(_MAX_BLOCK_ROWS, ((rows + 7) // 8) * 8)
    block_rows = max(block_rows, 8)
    padded_rows = -(-rows // block_rows) * block_rows
    padded_n = padded_rows * _LANE

    flat = x.reshape(-1)
    if padded_n != n:
        flat = jnp.pad(flat, (0, padded_n - n))
    x2 = flat.reshape(padded_rows, _LANE)

    grid = (padded_rows // block_rows,)

    out2 = pl.pallas_call(
        _h_swish_kernel,
        out_shape=jax.ShapeDtypeStruct((padded_rows, _LANE), dtype),
        grid_spec=pltpu.PrefetchScalarGridSpec(
            num_scalar_prefetch=0,
            grid=grid,
            in_specs=[pl.BlockSpec((block_rows, _LANE), lambda i: (i, 0))],
            out_specs=pl.BlockSpec((block_rows, _LANE), lambda i: (i, 0)),
        ),
        compiler_params=pltpu.CompilerParams(
            dimension_semantics=("parallel",),
            vmem_limit_bytes=32 * 1024 * 1024,
        ),
    )(x2)

    return out2.reshape(-1)[:n].reshape(orig_shape)


def _reference(x):
    return x * (jnp.clip(x + 3.0, 0.0, 6.0) / 6.0)


if __name__ == "__main__":
    # Small shapes consistent with the module (NCHW activations).
    B, C, H, W = 2, 4, 16, 16

    key = jax.random.PRNGKey(0)
    x = jax.random.normal(key, (B, C, H, W), dtype=jnp.float32) * 4.0  # cover both clip ends

    out = h_swish(x)
    out = jax.block_until_ready(out)

    ref = _reference(x)
    assert out.shape == (B, C, H, W)
    assert out.dtype == x.dtype
    assert jnp.allclose(out, ref, atol=1e-6, rtol=1e-6)

    print("KERNEL_OK")
</pallas_src>

<mosaic_0001>
module attributes {stable_mosaic.version = 11 : i64} {
  func.func @_h_swish_kernel(%arg0: i32, %arg1: memref<8x512xf32, #tpu.memory_space<vmem>>, %arg2: memref<8x512xf32, #tpu.memory_space<vmem>>) attributes {dimension_semantics = [#tpu.dimension_semantics<parallel>], iteration_bounds = array<i64: 1>, scalar_prefetch = 0 : i64, scratch_operands = 0 : i64, tpu.core_type = #tpu.core_type<tc>, window_params = [{transform_indices = @transform_0, window_bounds = array<i64: 8, 512>}, {transform_indices = @transform_1, window_bounds = array<i64: 8, 512>}]} {
    %c0 = arith.constant 0 : index
    %c0_0 = arith.constant 0 : index
    %0 = vector.load %arg1[%c0, %c0_0] : memref<8x512xf32, #tpu.memory_space<vmem>>, vector<8x512xf32>
    %cst = arith.constant 3.000000e+00 : f32
    %1 = vector.broadcast %cst : f32 to vector<8x512xf32>
    %2 = arith.addf %0, %1 : vector<8x512xf32>
    %cst_1 = arith.constant 0.000000e+00 : f32
    %cst_2 = arith.constant 6.000000e+00 : f32
    %3 = vector.broadcast %cst_1 : f32 to vector<8x512xf32>
    %4 = arith.maximumf %3, %2 : vector<8x512xf32>
    %5 = vector.broadcast %cst_2 : f32 to vector<8x512xf32>
    %6 = arith.minimumf %5, %4 : vector<8x512xf32>
    %cst_3 = arith.constant 0.166666672 : f32
    %7 = vector.broadcast %cst_3 : f32 to vector<8x512xf32>
    %8 = arith.mulf %6, %7 : vector<8x512xf32>
    %9 = arith.mulf %0, %8 : vector<8x512xf32>
    %c0_4 = arith.constant 0 : index
    %c0_5 = arith.constant 0 : index
    %10 = vector.load %arg2[%c0_4, %c0_5] : memref<8x512xf32, #tpu.memory_space<vmem>>, vector<8x512xf32>
    tpu.vector_store %arg2[%c0_4, %c0_5], %9 {strides = array<i32>} : memref<8x512xf32, #tpu.memory_space<vmem>>, vector<8x512xf32>,
    return
  }
  func.func @transform_0(%arg0: i32) -> (i32, i32) {
    %c0_i32 = arith.constant 0 : i32
    %c0_i32_0 = arith.constant 0 : i32
    return %arg0, %c0_i32 : i32, i32
  }
  func.func @transform_1(%arg0: i32) -> (i32, i32) {
    %c0_i32 = arith.constant 0 : i32
    %c0_i32_0 = arith.constant 0 : i32
    return %arg0, %c0_i32 : i32, i32
  }
}

</mosaic_0001>

<llo_original>
// kernel: tpu_custom_call.1
$region0: #{tpu_custom_call.1}
  #allocation0 [shape = 'u32[]', space=smem, size = 0x4, offset = 0x4, fixed_abs, tag = 'smem constant byte address 0x4 - core index']
  #allocation1 [shape = 'u32[72,128]{1,0:T(1,128)}', space=vmem, size = 0x9000, scoped, tag = 'internal scratch']
  %s0 = inlined_call_operand.hbm [shape: f32[8,512], index: 0, kind: input, shape index: {}]
  %s1 = inlined_call_operand.hbm [shape: f32[8,512], index: 1, kind: output, shape index: {}]
  %s2 = sld [smem:[#allocation0]]
  $region18: #{tpu_custom_call.1} parent=0
    _
  %s4 = ssub.s32 1, %s2
  %s5 = scalar_select 0, %s4, %s2
  $region1: #{tpu_custom_call.1} parent=0
    #allocation2 [shape = 'u8[16384]{0}', space=vmem, size = 0x4000, scoped, tag = 'input window, operand 0, single buffered']
    #allocation3 [shape = 's32[1]{0}', space=sflag, size = 0x4, scoped, tag = 'scoped memory for tpu_custom_call.1']
    #allocation4 [shape = 's32[1]{0}', space=sflag, size = 0x4, scoped, tag = 'scoped memory for tpu_custom_call.1']
    #allocation5 [shape = 'u8[16384]{0}', space=vmem, size = 0x4000, scoped, tag = 'output window, operand 0, single buffered']
    %6 = vsyncpa [#allocation3], 0
    %7 = vsyncpa [#allocation4], 0
    // Predicated region
    $region2: #{tpu_custom_call.1} parent=1 // pred_check
      _
    $region3: #{tpu_custom_call.1} parent=1 // pred_check_branch
      %9 = sbr.rel (0) target = $region5
    $region4: #{tpu_custom_call.1} parent=1 // pred_region
      %11 = vsyncadd [#allocation3], 0
      %s13 = sshll.u32 %s0, 4
      %s14 = int_to_ptr.hbm [resolvable:$true] %s13
      %s15 = sshll.u32 [#allocation2], 4
      %s16 = int_to_ptr.vmem [resolvable:$true] %s15
      %18 = dma.hbm_to_vmem [thread:$0]  %s14, 512, %s16, [#allocation3]
    $region5: #{tpu_custom_call.1} parent=1 // pred_fallthru
      _
    // Predicated region
    $region6: #{tpu_custom_call.1} parent=1 // pred_check
      _
    $region7: #{tpu_custom_call.1} parent=1 // pred_check_branch
      %20 = sbr.rel (0) target = $region9
    $region8: #{tpu_custom_call.1} parent=1 // pred_region
      %22 = dma.done [#allocation3], 512
    $region9: #{tpu_custom_call.1} parent=1 // pred_fallthru
      _
    %v23 = vld [vmem:[#allocation2] sm:$0xff]
    %v24 = vld [vmem:[#allocation2 + $0x8] sm:$0xff]
    %v25 = vld [vmem:[#allocation2 + $0x10] sm:$0xff]
    %v26 = vld [vmem:[#allocation2 + $0x18] sm:$0xff]
    %v27 = vadd.f32 %v23, 3.0
    %v28 = vadd.f32 %v24, 3.0
    %v29 = vadd.f32 %v25, 3.0
    %v30 = vadd.f32 %v26, 3.0
    %v31 = vmax.f32 %v27, 0.0
    %v32 = vmax.f32 %v28, 0.0
    %v33 = vmax.f32 %v29, 0.0
    %v34 = vmax.f32 %v30, 0.0
    %v35 = vmin.f32 %v31, 6.0
    %v36 = vmin.f32 %v32, 6.0
    %v37 = vmin.f32 %v33, 6.0
    %v38 = vmin.f32 %v34, 6.0
    %v39 = vmul.f32 %v35, 0.16666667
    %v40 = vmul.f32 %v36, 0.16666667
    %v41 = vmul.f32 %v37, 0.16666667
    %v42 = vmul.f32 %v38, 0.16666667
    %v43 = vmul.f32 %v23, %v39
    %v44 = vmul.f32 %v24, %v40
    %v45 = vmul.f32 %v25, %v41
    %v46 = vmul.f32 %v26, %v42
    %47 = vst [vmem:[#allocation5] sm:$0xff] %v43
    %48 = vst [vmem:[#allocation5 + $0x8] sm:$0xff] %v44
    %49 = vst [vmem:[#allocation5 + $0x10] sm:$0xff] %v45
    %50 = vst [vmem:[#allocation5 + $0x18] sm:$0xff] %v46
    // Predicated region
    $region10: #{tpu_custom_call.1} parent=1 // pred_check
      _
    $region11: #{tpu_custom_call.1} parent=1 // pred_check_branch
      %52 = sbr.rel (0) target = $region13
    $region12: #{tpu_custom_call.1} parent=1 // pred_region
      %54 = vsyncadd [#allocation4], 0
      %s56 = sshll.u32 [#allocation5], 4
      %s57 = int_to_ptr.vmem [resolvable:$true] %s56
      %s58 = sshll.u32 %s1, 4
      %s59 = int_to_ptr.hbm [resolvable:$true] %s58
      %61 = dma.vmem_to_hbm [thread:$0]  %s57, 512, %s59, [#allocation4]
    $region13: #{tpu_custom_call.1} parent=1 // pred_fallthru
      _
    // Predicated region
    $region14: #{tpu_custom_call.1} parent=1 // pred_check
      _
    $region15: #{tpu_custom_call.1} parent=1 // pred_check_branch
      %63 = sbr.rel (0) target = $region17
    $region16: #{tpu_custom_call.1} parent=1 // pred_region
      %65 = dma.done [#allocation4], 512
    $region17: #{tpu_custom_call.1} parent=1 // pred_fallthru
      _
    %66 = vsyncpa [#allocation3], 1
    %67 = vsyncpa [#allocation4], 1

</llo_original>
